<compile_context>
chip_gen: v7x
topology: tpu7x:2x2x1
jax: 0.10.0
libtpu: 0.0.40
codegen_flags: <defaults>
</compile_context>

<pallas_src>
import functools
import itertools

import numpy as np
import jax
import jax.numpy as jnp
from jax import lax
from jax.experimental import pallas as pl
from jax.experimental.pallas import tpu as pltpu


def make_edge_delta(connection_window):
    """Mirrors GLRFast.__init__: (dh, dw) offsets of the '1' window entries."""
    window_size = connection_window.shape[0]
    cw = np.asarray(connection_window).reshape(-1)
    m = np.arange(window_size) - window_size // 2
    edge_delta = np.array(list(itertools.product(m, m)), dtype=np.int32)
    return edge_delta[cw == 1]


def _glr_kernel(col_ref, x_ref, w_ref, o_ref, *, edge_delta, H, W):
    # col_ref: (1, HW)      int32 column index of every flat spatial position
    # x_ref:   (F, C, HW)   graph signals of F (batch, graph) pairs
    # w_ref:   (F, E, HW)   per-edge weights
    # o_ref:   (F, C, HW)
    HW = x_ref.shape[-1]
    x = x_ref[...].astype(jnp.float32)

    col = col_ref[...]                                   # (1, HW)
    idx = lax.broadcasted_iota(jnp.int32, (1, HW), 1)    # flat spatial index
    w_first = col == 0
    w_last = col == (W - 1)
    h_first = idx < W                                    # row == 0
    h_last = idx >= (H - 1) * W                          # row == H-1

    def shift(a, delta, step, first_mask, last_mask):
        """a[..., i + delta*step] along the flat lane axis with replicate
        clamping at the borders given by first_mask/last_mask.  Implemented as
        |delta| unit rolls + border selects (all XLU/VPU, no scratch slabs)."""
        # TODO(synk): for connection windows larger than 3x3 (|delta| > 1),
        # use a single roll per delta plus one select against an
        # edge-replicated row/column to keep the XLU slot from binding.
        out = a
        if delta == 0:
            return out
        sgn = 1 if delta > 0 else -1
        border = last_mask if sgn > 0 else first_mask
        for _ in range(abs(int(delta))):
            rolled = pltpu.roll(out, (-sgn * step) % HW, 2)
            out = jnp.where(border, out, rolled)
        return out

    # Hoist the lane (W-direction) shifts: one per distinct dw, reused over dh.
    uniq_dw = sorted({dw for _, dw in edge_delta})
    x_by_dw = {dw: shift(x, dw, 1, w_first, w_last) for dw in uniq_dw}

    wx = jnp.zeros(x.shape, jnp.float32)
    for e, (dh, dw) in enumerate(edge_delta):
        nb = shift(x_by_dw[dw], dh, W, h_first, h_last)
        w_e = w_ref[:, pl.ds(e, 1), :].astype(jnp.float32)   # (F, 1, HW)
        wx = wx + w_e * nb                                   # broadcast over C
    o_ref[...] = (x - wx).astype(o_ref.dtype)


def _choose_tiles(n, c, e, hw, itemsize, budget_bytes):
    """Pick (F, tc): fold factor over the B*G axis and channel tile size."""
    def step_bytes(f, tc):
        # x block + out block + w block for one grid step (pre double-buffer).
        return (2 * f * tc + f * e) * hw * itemsize

    divisors = [f for f in range(1, n + 1) if n % f == 0]
    fits = [f for f in divisors if step_bytes(f, c) <= budget_bytes]
    if fits:
        # Prefer >= 2 grid steps so both v7x TensorCores get work.
        multi = [f for f in fits if n // f >= 2]
        return (max(multi) if multi else max(fits)), c
    # A single (b, g) unit over all channels exceeds the budget: tile channels
    # (channels are independent; tc must be a multiple of 8 for f32 blocks).
    tc_cands = [tc for tc in range(8, c, 8)
                if c % tc == 0 and step_bytes(1, tc) <= budget_bytes]
    tc = max(tc_cands) if tc_cands else c
    # TODO(synk): for extreme H*W additionally tile H with a max|dh| halo
    # (overlapping index_map / manual DMA); plain non-overlapping BlockSpec
    # tiling of H would clamp at interior tile boundaries and be wrong.
    return 1, tc


def glr_forward_pallas(patchs, edge_weights, node_degree, edge_delta,
                       *, block_bytes_target=4 << 20):
    """GLRFast.forward.
    patchs:       (B, G, C, H, W)
    edge_weights: (B, G, E, H, W)
    node_degree:  (B, G, H, W)   -- unused by forward (signature parity)
    """
    del node_degree  # not used by op_L_norm / forward
    B, G, C, H, W = patchs.shape
    E = edge_weights.shape[2]
    N, HW = B * G, H * W
    itemsize = jnp.dtype(patchs.dtype).itemsize

    # Contiguous (free) reshapes only: fold (B, G) and flatten (H, W) so the
    # last axis is lane-dense even when W < 128.  No transposes.
    x = patchs.reshape(N, C, HW)
    w = edge_weights.reshape(N, E, HW)
    col_ids = (jnp.arange(HW, dtype=jnp.int32) % W).reshape(1, HW)

    F, tc = _choose_tiles(N, C, E, HW, itemsize, block_bytes_target)
    edge_delta_t = tuple((int(dh), int(dw)) for dh, dw in np.asarray(edge_delta))
    kernel = functools.partial(_glr_kernel, edge_delta=edge_delta_t, H=H, W=W)

    out = pl.pallas_call(
        kernel,
        out_shape=jax.ShapeDtypeStruct((N, C, HW), patchs.dtype),
        grid=(N // F, C // tc),
        in_specs=[
            pl.BlockSpec((1, HW), lambda n, c: (0, 0)),          # col ids, resident
            pl.BlockSpec((F, tc, HW), lambda n, c: (n, c, 0)),   # x
            pl.BlockSpec((F, E, HW), lambda n, c: (n, 0, 0)),    # w, resident over c
        ],
        out_specs=pl.BlockSpec((F, tc, HW), lambda n, c: (n, c, 0)),
        compiler_params=pltpu.CompilerParams(
            dimension_semantics=("parallel", "parallel"),
            vmem_limit_bytes=48 * 1024 * 1024),
    )(col_ids, x, w)
    return out.reshape(B, G, C, H, W)


def glr_forward_ref(patchs, edge_weights, node_degree, edge_delta):
    """Pure-JAX mirror of the PyTorch module (replicate pad + stack + einsum)."""
    del node_degree
    B, G, C, H, W = patchs.shape
    edge_delta = np.asarray(edge_delta)
    pad_h = int(np.abs(edge_delta[:, 0].min()))
    pad_w = int(np.abs(edge_delta[:, 1].min()))
    x = patchs.reshape(B, G * C, H, W)
    xp = jnp.pad(x, ((0, 0), (0, 0), (pad_h, pad_h), (pad_w, pad_w)), mode='edge')
    nbs = [xp[:, :, pad_h + dh:pad_h + dh + H, pad_w + dw:pad_w + dw + W]
           for dh, dw in edge_delta]
    E = edge_delta.shape[0]
    nb = jnp.stack(nbs, axis=2).reshape(B, G, C, E, H, W)
    wx = jnp.einsum('bgceHW,bgeHW->bgcHW', nb, edge_weights)
    return patchs - wx


if __name__ == "__main__":
    key = jax.random.PRNGKey(0)
    k_x, k_w = jax.random.split(key)

    B, G, C, H, W = 2, 2, 4, 16, 16          # batch, n_graphs, n_node_channels, H, W
    connection_window = np.ones((3, 3), dtype=np.int64)
    edge_delta = make_edge_delta(connection_window)
    E = edge_delta.shape[0]                  # 9 edges for a full 3x3 window

    patchs = jax.random.normal(k_x, (B, G, C, H, W), jnp.float32)
    # edge weights come out of a softmax over the edge axis in the module
    edge_weights = jax.nn.softmax(
        jax.random.normal(k_w, (B, G, E, H, W), jnp.float32), axis=2)
    node_degree = edge_weights.sum(axis=2)

    out = jax.block_until_ready(
        glr_forward_pallas(patchs, edge_weights, node_degree, edge_delta))
    ref = jax.block_until_ready(
        glr_forward_ref(patchs, edge_weights, node_degree, edge_delta))

    assert out.shape == (B, G, C, H, W)
    err = float(jnp.max(jnp.abs(out - ref)))
    assert jnp.allclose(out, ref, atol=1e-4, rtol=1e-4), err
    print("KERNEL_OK")
</pallas_src>

<mosaic_0001>
module attributes {stable_mosaic.version = 11 : i64} {
  func.func @_glr_kernel(%arg0: i32, %arg1: i32, %arg2: memref<1x256xi32, #tpu.memory_space<vmem>>, %arg3: memref<2x4x256xf32, #tpu.memory_space<vmem>>, %arg4: memref<2x9x256xf32, #tpu.memory_space<vmem>>, %arg5: memref<2x4x256xf32, #tpu.memory_space<vmem>>) attributes {dimension_semantics = [#tpu.dimension_semantics<parallel>, #tpu.dimension_semantics<parallel>], iteration_bounds = array<i64: 2, 1>, scalar_prefetch = 0 : i64, scratch_operands = 0 : i64, tpu.core_type = #tpu.core_type<tc>, window_params = [{pipeline_mode = #tpu.pipeline_mode<synchronous>, transform_indices = @transform_0, window_bounds = array<i64: 1, 256>}, {transform_indices = @transform_1, window_bounds = array<i64: 2, 4, 256>}, {transform_indices = @transform_2, window_bounds = array<i64: 2, 9, 256>}, {transform_indices = @transform_3, window_bounds = array<i64: 2, 4, 256>}]} {
    %c0 = arith.constant 0 : index
    %c0_0 = arith.constant 0 : index
    %c0_1 = arith.constant 0 : index
    %0 = vector.load %arg3[%c0, %c0_0, %c0_1] : memref<2x4x256xf32, #tpu.memory_space<vmem>>, vector<2x4x256xf32>
    %c0_2 = arith.constant 0 : index
    %c0_3 = arith.constant 0 : index
    %1 = vector.load %arg2[%c0_2, %c0_3] : memref<1x256xi32, #tpu.memory_space<vmem>>, vector<1x256xi32>
    %2 = tpu.iota {dimensions = array<i32: 1>} : vector<1x256xi32>
    %c0_i32 = arith.constant 0 : i32
    %3 = vector.broadcast %c0_i32 : i32 to vector<1x256xi32>
    %4 = arith.cmpi eq, %1, %3 : vector<1x256xi32>
    %c15_i32 = arith.constant 15 : i32
    %5 = vector.broadcast %c15_i32 : i32 to vector<1x256xi32>
    %6 = arith.cmpi eq, %1, %5 : vector<1x256xi32>
    %c16_i32 = arith.constant 16 : i32
    %7 = vector.broadcast %c16_i32 : i32 to vector<1x256xi32>
    %8 = arith.cmpi slt, %2, %7 : vector<1x256xi32>
    %c240_i32 = arith.constant 240 : i32
    %9 = vector.broadcast %c240_i32 : i32 to vector<1x256xi32>
    %10 = arith.cmpi sge, %2, %9 : vector<1x256xi32>
    %c1_i32 = arith.constant 1 : i32
    %11 = tpu.dynamic_rotate %0 by %c1_i32 dim 2 : vector<2x4x256xf32>, i32 -> vector<2x4x256xf32>
    %12 = vector.shape_cast %4 : vector<1x256xi1> to vector<1x1x256xi1>
    %13 = vector.broadcast %12 : vector<1x1x256xi1> to vector<2x4x256xi1>
    %14 = arith.select %13, %0, %11 : vector<2x4x256xi1>, vector<2x4x256xf32>
    %c255_i32 = arith.constant 255 : i32
    %15 = tpu.dynamic_rotate %0 by %c255_i32 dim 2 : vector<2x4x256xf32>, i32 -> vector<2x4x256xf32>
    %16 = vector.shape_cast %6 : vector<1x256xi1> to vector<1x1x256xi1>
    %17 = vector.broadcast %16 : vector<1x1x256xi1> to vector<2x4x256xi1>
    %18 = arith.select %17, %0, %15 : vector<2x4x256xi1>, vector<2x4x256xf32>
    %cst = arith.constant 0.000000e+00 : f32
    %19 = vector.broadcast %cst : f32 to vector<2x4x256xf32>
    %c16_i32_4 = arith.constant 16 : i32
    %20 = tpu.dynamic_rotate %14 by %c16_i32_4 dim 2 : vector<2x4x256xf32>, i32 -> vector<2x4x256xf32>
    %21 = vector.shape_cast %8 : vector<1x256xi1> to vector<1x1x256xi1>
    %22 = vector.broadcast %21 : vector<1x1x256xi1> to vector<2x4x256xi1>
    %23 = arith.select %22, %14, %20 : vector<2x4x256xi1>, vector<2x4x256xf32>
    %c0_5 = arith.constant 0 : index
    %c0_6 = arith.constant 0 : index
    %c0_7 = arith.constant 0 : index
    %24 = vector.load %arg4[%c0_5, %c0_6, %c0_7] : memref<2x9x256xf32, #tpu.memory_space<vmem>>, vector<2x1x256xf32>
    %25 = vector.broadcast %24 : vector<2x1x256xf32> to vector<2x4x256xf32>
    %26 = arith.mulf %25, %23 : vector<2x4x256xf32>
    %27 = arith.addf %19, %26 : vector<2x4x256xf32>
    %c16_i32_8 = arith.constant 16 : i32
    %28 = tpu.dynamic_rotate %0 by %c16_i32_8 dim 2 : vector<2x4x256xf32>, i32 -> vector<2x4x256xf32>
    %29 = vector.shape_cast %8 : vector<1x256xi1> to vector<1x1x256xi1>
    %30 = vector.broadcast %29 : vector<1x1x256xi1> to vector<2x4x256xi1>
    %31 = arith.select %30, %0, %28 : vector<2x4x256xi1>, vector<2x4x256xf32>
    %c0_9 = arith.constant 0 : index
    %c1 = arith.constant 1 : index
    %c0_10 = arith.constant 0 : index
    %32 = vector.load %arg4[%c0_9, %c1, %c0_10] : memref<2x9x256xf32, #tpu.memory_space<vmem>>, vector<2x1x256xf32>
    %33 = vector.broadcast %32 : vector<2x1x256xf32> to vector<2x4x256xf32>
    %34 = arith.mulf %33, %31 : vector<2x4x256xf32>
    %35 = arith.addf %27, %34 : vector<2x4x256xf32>
    %c16_i32_11 = arith.constant 16 : i32
    %36 = tpu.dynamic_rotate %18 by %c16_i32_11 dim 2 : vector<2x4x256xf32>, i32 -> vector<2x4x256xf32>
    %37 = vector.shape_cast %8 : vector<1x256xi1> to vector<1x1x256xi1>
    %38 = vector.broadcast %37 : vector<1x1x256xi1> to vector<2x4x256xi1>
    %39 = arith.select %38, %18, %36 : vector<2x4x256xi1>, vector<2x4x256xf32>
    %c0_12 = arith.constant 0 : index
    %c2 = arith.constant 2 : index
    %c0_13 = arith.constant 0 : index
    %40 = vector.load %arg4[%c0_12, %c2, %c0_13] : memref<2x9x256xf32, #tpu.memory_space<vmem>>, vector<2x1x256xf32>
    %41 = vector.broadcast %40 : vector<2x1x256xf32> to vector<2x4x256xf32>
    %42 = arith.mulf %41, %39 : vector<2x4x256xf32>
    %43 = arith.addf %35, %42 : vector<2x4x256xf32>
    %c0_14 = arith.constant 0 : index
    %c3 = arith.constant 3 : index
    %c0_15 = arith.constant 0 : index
    %44 = vector.load %arg4[%c0_14, %c3, %c0_15] : memref<2x9x256xf32, #tpu.memory_space<vmem>>, vector<2x1x256xf32>
    %45 = vector.broadcast %44 : vector<2x1x256xf32> to vector<2x4x256xf32>
    %46 = arith.mulf %45, %14 : vector<2x4x256xf32>
    %47 = arith.addf %43, %46 : vector<2x4x256xf32>
    %c0_16 = arith.constant 0 : index
    %c4 = arith.constant 4 : index
    %c0_17 = arith.constant 0 : index
    %48 = vector.load %arg4[%c0_16, %c4, %c0_17] : memref<2x9x256xf32, #tpu.memory_space<vmem>>, vector<2x1x256xf32>
    %49 = vector.broadcast %48 : vector<2x1x256xf32> to vector<2x4x256xf32>
    %50 = arith.mulf %49, %0 : vector<2x4x256xf32>
    %51 = arith.addf %47, %50 : vector<2x4x256xf32>
    %c0_18 = arith.constant 0 : index
    %c5 = arith.constant 5 : index
    %c0_19 = arith.constant 0 : index
    %52 = vector.load %arg4[%c0_18, %c5, %c0_19] : memref<2x9x256xf32, #tpu.memory_space<vmem>>, vector<2x1x256xf32>
    %53 = vector.broadcast %52 : vector<2x1x256xf32> to vector<2x4x256xf32>
    %54 = arith.mulf %53, %18 : vector<2x4x256xf32>
    %55 = arith.addf %51, %54 : vector<2x4x256xf32>
    %c240_i32_20 = arith.constant 240 : i32
    %56 = tpu.dynamic_rotate %14 by %c240_i32_20 dim 2 : vector<2x4x256xf32>, i32 -> vector<2x4x256xf32>
    %57 = vector.shape_cast %10 : vector<1x256xi1> to vector<1x1x256xi1>
    %58 = vector.broadcast %57 : vector<1x1x256xi1> to vector<2x4x256xi1>
    %59 = arith.select %58, %14, %56 : vector<2x4x256xi1>, vector<2x4x256xf32>
    %c0_21 = arith.constant 0 : index
    %c6 = arith.constant 6 : index
    %c0_22 = arith.constant 0 : index
    %60 = vector.load %arg4[%c0_21, %c6, %c0_22] : memref<2x9x256xf32, #tpu.memory_space<vmem>>, vector<2x1x256xf32>
    %61 = vector.broadcast %60 : vector<2x1x256xf32> to vector<2x4x256xf32>
    %62 = arith.mulf %61, %59 : vector<2x4x256xf32>
    %63 = arith.addf %55, %62 : vector<2x4x256xf32>
    %c240_i32_23 = arith.constant 240 : i32
    %64 = tpu.dynamic_rotate %0 by %c240_i32_23 dim 2 : vector<2x4x256xf32>, i32 -> vector<2x4x256xf32>
    %65 = vector.shape_cast %10 : vector<1x256xi1> to vector<1x1x256xi1>
    %66 = vector.broadcast %65 : vector<1x1x256xi1> to vector<2x4x256xi1>
    %67 = arith.select %66, %0, %64 : vector<2x4x256xi1>, vector<2x4x256xf32>
    %c0_24 = arith.constant 0 : index
    %c7 = arith.constant 7 : index
    %c0_25 = arith.constant 0 : index
    %68 = vector.load %arg4[%c0_24, %c7, %c0_25] : memref<2x9x256xf32, #tpu.memory_space<vmem>>, vector<2x1x256xf32>
    %69 = vector.broadcast %68 : vector<2x1x256xf32> to vector<2x4x256xf32>
    %70 = arith.mulf %69, %67 : vector<2x4x256xf32>
    %71 = arith.addf %63, %70 : vector<2x4x256xf32>
    %c240_i32_26 = arith.constant 240 : i32
    %72 = tpu.dynamic_rotate %18 by %c240_i32_26 dim 2 : vector<2x4x256xf32>, i32 -> vector<2x4x256xf32>
    %73 = vector.shape_cast %10 : vector<1x256xi1> to vector<1x1x256xi1>
    %74 = vector.broadcast %73 : vector<1x1x256xi1> to vector<2x4x256xi1>
    %75 = arith.select %74, %18, %72 : vector<2x4x256xi1>, vector<2x4x256xf32>
    %c0_27 = arith.constant 0 : index
    %c8 = arith.constant 8 : index
    %c0_28 = arith.constant 0 : index
    %76 = vector.load %arg4[%c0_27, %c8, %c0_28] : memref<2x9x256xf32, #tpu.memory_space<vmem>>, vector<2x1x256xf32>
    %77 = vector.broadcast %76 : vector<2x1x256xf32> to vector<2x4x256xf32>
    %78 = arith.mulf %77, %75 : vector<2x4x256xf32>
    %79 = arith.addf %71, %78 : vector<2x4x256xf32>
    %80 = arith.subf %0, %79 : vector<2x4x256xf32>
    %c0_29 = arith.constant 0 : index
    %c0_30 = arith.constant 0 : index
    %c0_31 = arith.constant 0 : index
    %81 = vector.load %arg5[%c0_29, %c0_30, %c0_31] : memref<2x4x256xf32, #tpu.memory_space<vmem>>, vector<2x4x256xf32>
    tpu.vector_store %arg5[%c0_29, %c0_30, %c0_31], %80 {strides = array<i32>} : memref<2x4x256xf32, #tpu.memory_space<vmem>>, vector<2x4x256xf32>,
    return
  }
  func.func @transform_0(%arg0: i32, %arg1: i32) -> (i32, i32) {
    %c0_i32 = arith.constant 0 : i32
    %c0_i32_0 = arith.constant 0 : i32
    %c0_i32_1 = arith.constant 0 : i32
    return %c0_i32, %c0_i32_0 : i32, i32
  }
  func.func @transform_1(%arg0: i32, %arg1: i32) -> (i32, i32, i32) {
    %c0_i32 = arith.constant 0 : i32
    %c0_i32_0 = arith.constant 0 : i32
    return %arg0, %arg1, %c0_i32 : i32, i32, i32
  }
  func.func @transform_2(%arg0: i32, %arg1: i32) -> (i32, i32, i32) {
    %c0_i32 = arith.constant 0 : i32
    %c0_i32_0 = arith.constant 0 : i32
    %c0_i32_1 = arith.constant 0 : i32
    return %arg0, %c0_i32, %c0_i32_0 : i32, i32, i32
  }
  func.func @transform_3(%arg0: i32, %arg1: i32) -> (i32, i32, i32) {
    %c0_i32 = arith.constant 0 : i32
    %c0_i32_0 = arith.constant 0 : i32
    return %arg0, %arg1, %c0_i32 : i32, i32, i32
  }
}

</mosaic_0001>

<llo_original>
// kernel: tpu_custom_call.1
$region0: #{tpu_custom_call.1}
  #allocation0 [shape = 'u32[]', space=smem, size = 0x4, offset = 0x4, fixed_abs, tag = 'smem constant byte address 0x4 - core index']
  #allocation1 [shape = 'u32[144,128]{1,0:T(1,128)}', space=vmem, size = 0x12000, scoped, tag = 'internal scratch']
  %s0 = inlined_call_operand.vmem [shape: s32[1,256], index: 0, kind: input, shape index: {}]
  %s1 = inlined_call_operand.vmem [shape: f32[4,4,256], index: 1, kind: input, shape index: {}]
  %s2 = inlined_call_operand.vmem [shape: f32[4,9,256], index: 2, kind: input, shape index: {}]
  %s3 = inlined_call_operand.hbm [shape: f32[4,4,256], index: 3, kind: output, shape index: {}]
  %s4 = sld [smem:[#allocation0]]
  $region45: #{tpu_custom_call.1} parent=0
    _
  %s6 = ssub.s32 1, %s4
  %s7 = scalar_select 0, %s6, %s4
  $region1: #{tpu_custom_call.1} parent=0
    #allocation2 [shape = 'u8[16384]{0}', space=vmem, size = 0x4000, scoped, tag = 'output window, operand 0']
    #allocation3 [shape = 's32[2]{0}', space=sflag, size = 0x8, scoped, tag = 'scoped memory for tpu_custom_call.1']
    %8 = vsyncpa [#allocation3], 0
    %s9 = scalar_lea.sflag [#allocation3], 1
    %10 = vsyncpa %s9, 0
    loop: start=0, step=1, limit=4
    $region2: #{tpu_custom_call.1} parent=1 // loop_pre_header
      _
    $region3: #{tpu_custom_call.1} parent=1 // loop_header
      %s12 = sphi 0, %s16
      %p13 = scmp.ge.s32.totalorder %s12, 4
      %s19 = sphi 0, %s31
      %s20 = sphi 0, %s27
      %s21 = sphi 0, %s19
      %s22 = sphi 0, %s20
      %s23 = sphi 0, %s21
      %s24 = sphi 0, %s22
      %s32 = sphi 0, %s32
      %s34 = sphi 0, %s32
      %s35 = sphi 0, %s34
      %s49 = sphi 0, %s35
      %s57 = sphi 0, %s59
      %s60 = sphi 0, %s57
      %s61 = sphi 0, %s60
      %s77 = sphi 0, %s61
      %s83 = sphi 0, %s85
      %s86 = sphi 0, %s83
      %s87 = sphi 0, %s86
      %s103 = sphi 0, %s87
      %s111 = sphi 0, %s113
      %s114 = sphi 0, %s111
      %s115 = sphi 0, %s114
      %s131 = sphi 0, %s115
    $region4: #{tpu_custom_call.1} parent=1 // loop_header_branch
      %15 = sbr.rel (%p13) target = $region8
    $region5: #{tpu_custom_call.1} parent=1 // loop_body
      %s17 = ssub.s32 %s12, 1
      %s18 = ssub.s32 %s12, 2
      %s25 = sadd.s32 1, %s20
      %p26 = scmp.ge.s32.totalorder %s25, 1
      %s27 = scalar_select %p26, 0, %s25
      %s28 = sadd.s32 1, %s19
      %s29 = scalar_select %p26, %s28, %s19
      %p30 = scmp.ge.s32.totalorder %s29, 2
      %s31 = scalar_select %p30, 0, %s29
      %s33 = sadd.s32 %s32, 1
      %p36 = scmp.eq.s32.totalorder %s12, 1
      %p37 = scmp.ne.s32.totalorder %s32, %s34
      %p38 = scmp.eq.s32.totalorder %s12, 0
      %p39 = por %p37, %p38
      %p40 = scmp.ne.s32.totalorder %s32, %s34
      %p41 = scmp.eq.s32.totalorder %s17, 1
      %p42 = por %p40, %p41
      %p43 = scmp.ne.s32.totalorder %s34, %s35
      %p44 = scmp.eq.s32.totalorder %s17, 0
      %p45 = por %p43, %p44
      %p46 = scmp.ne.s32.totalorder %s34, %s35
      %p47 = scmp.eq.s32.totalorder %s18, 1
      %p48 = por %p46, %p47
      %p50 = scmp.ne.s32.totalorder %s35, %s49
      %p51 = scmp.eq.s32.totalorder %s18, 0
      %p52 = por %p50, %p51
      %s53 = ssub.s32 %s19, %s31
      %s54 = ssub.s32 %s20, %s27
      %s55 = sor.u32 %s53, %s54
      %p56 = scmp.eq.s32.totalorder %s55, 0
      %s58 = sadd.s32 %s57, 1
      %s59 = scalar_select %p56, %s57, %s58
      %p62 = pneg %p56
      %p63 = scmp.eq.s32.totalorder %s12, 1
      %p64 = por %p62, %p63
      %p65 = scmp.ne.s32.totalorder %s57, %s60
      %p66 = scmp.eq.s32.totalorder %s12, 0
      %p67 = por %p65, %p66
      %p68 = scmp.ne.s32.totalorder %s57, %s60
      %p69 = scmp.eq.s32.totalorder %s17, 1
      %p70 = por %p68, %p69
      %p71 = scmp.ne.s32.totalorder %s60, %s61
      %p72 = scmp.eq.s32.totalorder %s17, 0
      %p73 = por %p71, %p72
      %p74 = scmp.ne.s32.totalorder %s60, %s61
      %p75 = scmp.eq.s32.totalorder %s18, 1
      %p76 = por %p74, %p75
      %p78 = scmp.ne.s32.totalorder %s61, %s77
      %p79 = scmp.eq.s32.totalorder %s18, 0
      %p80 = por %p78, %p79
      %s81 = ssub.s32 %s19, %s31
      %p82 = scmp.eq.s32.totalorder %s81, 0
      %s84 = sadd.s32 %s83, 1
      %s85 = scalar_select %p82, %s83, %s84
      %p88 = pneg %p82
      %p89 = scmp.eq.s32.totalorder %s12, 1
      %p90 = por %p88, %p89
      %p91 = scmp.ne.s32.totalorder %s83, %s86
      %p92 = scmp.eq.s32.totalorder %s12, 0
      %p93 = por %p91, %p92
      %p94 = scmp.ne.s32.totalorder %s83, %s86
      %p95 = scmp.eq.s32.totalorder %s17, 1
      %p96 = por %p94, %p95
      %p97 = scmp.ne.s32.totalorder %s86, %s87
      %p98 = scmp.eq.s32.totalorder %s17, 0
      %p99 = por %p97, %p98
      %p100 = scmp.ne.s32.totalorder %s86, %s87
      %p101 = scmp.eq.s32.totalorder %s18, 1
      %p102 = por %p100, %p101
      %p104 = scmp.ne.s32.totalorder %s87, %s103
      %p105 = scmp.eq.s32.totalorder %s18, 0
      %p106 = por %p104, %p105
      %s107 = ssub.s32 %s19, %s31
      %s108 = ssub.s32 %s20, %s27
      %s109 = sor.u32 %s107, %s108
      %p110 = scmp.eq.s32.totalorder %s109, 0
      %s112 = sadd.s32 %s111, 1
      %s113 = scalar_select %p110, %s111, %s112
      %p116 = pneg %p110
      %p117 = scmp.eq.s32.totalorder %s12, 1
      %p118 = por %p116, %p117
      %p119 = scmp.ne.s32.totalorder %s111, %s114
      %p120 = scmp.eq.s32.totalorder %s12, 0
      %p121 = por %p119, %p120
      %p122 = scmp.ne.s32.totalorder %s111, %s114
      %p123 = scmp.eq.s32.totalorder %s17, 1
      %p124 = por %p122, %p123
      %p125 = scmp.ne.s32.totalorder %s114, %s115
      %p126 = scmp.eq.s32.totalorder %s17, 0
      %p127 = por %p125, %p126
      %p128 = scmp.ne.s32.totalorder %s114, %s115
      %p129 = scmp.eq.s32.totalorder %s18, 1
      %p130 = por %p128, %p129
      %p132 = scmp.ne.s32.totalorder %s115, %s131
      %p133 = scmp.eq.s32.totalorder %s18, 0
      %p134 = por %p132, %p133
      %p135 = scmp.le.s32.totalorder 1, %s12
      %p136 = scmp.lt.s32.totalorder %s12, 3
      %p137 = pnand %p135, %p136
      %p138 = pneg %p137
      // Predicated region
      $region9: #{tpu_custom_call.1} parent=5 // pred_check
        _
      $region10: #{tpu_custom_call.1} parent=5 // pred_check_branch
        %140 = sbr.rel (%p137) target = $region12
      $region11: #{tpu_custom_call.1} parent=5 // pred_region
        %s141 = ssub.s32 %s12, 1
        // Predicated region
        $region13: #{tpu_custom_call.1} parent=11 // pred_check
          %p142 = pneg %p45
        $region14: #{tpu_custom_call.1} parent=11 // pred_check_branch
          %144 = sbr.rel (%p142) target = $region16
        $region15: #{tpu_custom_call.1} parent=11 // pred_region
          _
        $region16: #{tpu_custom_call.1} parent=11 // pred_fallthru
          _
      $region12: #{tpu_custom_call.1} parent=5 // pred_fallthru
        _
      %p145 = scmp.lt.s32.totalorder %s12, 2
      // Predicated region
      $region17: #{tpu_custom_call.1} parent=5 // pred_check
        %p146 = pneg %p145
      $region18: #{tpu_custom_call.1} parent=5 // pred_check_branch
        %148 = sbr.rel (%p146) target = $region20
      $region19: #{tpu_custom_call.1} parent=5 // pred_region
        // Predicated region
        $region21: #{tpu_custom_call.1} parent=19 // pred_check
          %p149 = pneg %p67
        $region22: #{tpu_custom_call.1} parent=19 // pred_check_branch
          %151 = sbr.rel (%p149) target = $region24
        $region23: #{tpu_custom_call.1} parent=19 // pred_region
          %s152 = smul.u32 2, %s19
          %p153 = scmp.lt.s32.totalorder %s152, 3
          %s154 = scalar_select %p153, %s152, 3
          %p155 = scmp.lt.s32.totalorder %s20, 0
          %s156 = scalar_select %p155, %s20, 0
          %s157 = smul.addr %s156, 2
          %s158 = smul.addr %s154, 2
          %s159 = sadd.s32 %s157, %s158
          %s160 = smul.addr %s159, 4
          %s161 = scalar_lea.vmem %s1, %s160
          %s162 = smul.u32 2, %s19
        $region24: #{tpu_custom_call.1} parent=19 // pred_fallthru
          _
        // Predicated region
        $region25: #{tpu_custom_call.1} parent=19 // pred_check
          %p163 = pneg %p93
        $region26: #{tpu_custom_call.1} parent=19 // pred_check_branch
          %165 = sbr.rel (%p163) target = $region28
        $region27: #{tpu_custom_call.1} parent=19 // pred_region
          %s166 = smul.u32 2, %s19
          %p167 = scmp.lt.s32.totalorder %s166, 3
          %s168 = scalar_select %p167, %s166, 3
          %s169 = smul.addr %s168, 4
          %s170 = smul.addr %s169, 8
          %s171 = scalar_lea.vmem %s2, %s170
          %s172 = smul.u32 2, %s19
        $region28: #{tpu_custom_call.1} parent=19 // pred_fallthru
          _
      $region20: #{tpu_custom_call.1} parent=5 // pred_fallthru
        _
      %p173 = scmp.le.s32.totalorder 1, %s12
      %p174 = scmp.lt.s32.totalorder %s12, 3
      %p175 = pnand %p173, %p174
      %p176 = pneg %p175
      // Predicated region
      $region29: #{tpu_custom_call.1} parent=5 // pred_check
        _
      $region30: #{tpu_custom_call.1} parent=5 // pred_check_branch
        %178 = sbr.rel (%p175) target = $region32
      $region31: #{tpu_custom_call.1} parent=5 // pred_region
        %s179 = ssub.s32 %s12, 1
        %p180 = pneg %p45
        %p181 = pneg %p42
        %s182 = smul.u32 2, %s21
        %p183 = scmp.lt.s32.totalorder %s182, 3
        %s184 = scalar_select %p183, %s182, 3
        %p185 = scmp.lt.s32.totalorder %s22, 0
        %s186 = scalar_select %p185, %s22, 0
        %s187 = smul.addr %s186, 2
        %s188 = smul.addr %s184, 2
        %s189 = sadd.s32 %s187, %s188
        %s190 = smul.addr %s189, 4
        %s191 = scalar_lea.vmem %s1, %s190
        %p192 = pneg %p73
        %p193 = pneg %p70
        %s194 = smul.u32 2, %s21
        %p195 = scmp.lt.s32.totalorder %s194, 3
        %s196 = scalar_select %p195, %s194, 3
        %s197 = smul.addr %s196, 4
        %s198 = smul.addr %s197, 8
        %s199 = scalar_lea.vmem %s2, %s198
        %p200 = pneg %p99
        %p201 = pneg %p96
        %p202 = pneg %p127
        %p203 = pneg %p124
        %s204 = sand.u32 %s114, 1
        %s205 = scalar_lea.sflag [#allocation3], %s204
        %s206 = sand.u32 %s114, 1
        %s207 = smul.addr %s206, 16
        %s208 = scalar_lea.vmem [#allocation2], %s207
        %s209 = smul.u32 2, %s21
        %p210 = scmp.lt.s32.totalorder %s209, 3
        %s211 = scalar_select %p210, %s209, 3
        %p212 = scmp.lt.s32.totalorder %s22, 0
        %s213 = scalar_select %p212, %s22, 0
        %s214 = smul.addr %s213, 2
        %s215 = smul.addr %s211, 2
        %s216 = sadd.s32 %s214, %s215
        %s217 = smul.addr %s216, 4
        %s218 = scalar_lea.vmem %s1, %s217
        %s219 = smul.u32 2, %s21
        %s220 = smul.u32 2, %s21
        %p221 = scmp.lt.s32.totalorder %s220, 3
        %s222 = scalar_select %p221, %s220, 3
        %s223 = smul.addr %s222, 4
        %s224 = smul.addr %s223, 8
        %s225 = scalar_lea.vmem %s2, %s224
        %s226 = smul.u32 2, %s21
        %s227 = smul.u32 2, %s21
        %v228 = vld [vmem:[%s218] sm:$0xff]
        %v229 = vld [vmem:[%s218 + $0x8] sm:$0xff]
        %v230 = vld [vmem:[%s0] sm:$0x3]
        %v231 = vlaneseq
        %v232 = vand.u32 %v231, 127
        %v233 = vadd.s32 %v232, 128
        %vm234 = vcmp.eq.s32.totalorder %v230, 0
        %vm235 = vcmp.eq.s32.totalorder %v230, 15
        %vm236 = vcmp.lt.s32.totalorder %v232, 16
        %vm237 = vcmp.lt.s32.totalorder %v233, 16
        %vm238 = vcmp.ge.s32.totalorder %v232, 240
        %vm239 = vcmp.ge.s32.totalorder %v233, 240
        %v242 = vcombine.high %v228, %v228
        %v243 = vcombine.high %v229, %v229
        %246 = vrot.lane.b32.xlu0 %v228, 1
        %v247 = vpop.permute.xlu0 %246
        %248 = vrot.lane.b32.xlu0 %v229, 1
        %v249 = vpop.permute.xlu0 %248
        %250 = vrot.lane.b32.xlu0 %v242, 1
        %v251 = vpop.permute.xlu0 %250
        %252 = vrot.lane.b32.xlu0 %v243, 1
        %v253 = vpop.permute.xlu0 %252
        %vm254 = vcmp.lt.s32.totalorder %v232, 1
        %v255 = vsel %vm254, %v247, %v251
        %v256 = vsel %vm254, %v249, %v253
        %v257 = vsel %vm254, %v251, %v247
        %v258 = vsel %vm254, %v253, %v249
        %v259 = vsel %vm234, 1, 0
        %v260 = vlaneseq
        %v261 = vshrl.u32 %v260, 7
        %v262 = vsub.s32 0, %v261
        %v263 = vrot.slane %v259, %v262
        %v264 = vlaneseq
        %v265 = vshrl.u32 %v264, 7
        %v266 = vsub.s32 1, %v265
        %v267 = vrot.slane %v259, %v266
        %vm268 = vcmp.eq.s32.totalorder %v263, 1
        %vm269 = vcmp.eq.s32.totalorder %v267, 1
        %v270 = vsel %vm268, %v228, %v257
        %v271 = vsel %vm269, %v242, %v255
        %v272 = vsel %vm268, %v229, %v258
        %v273 = vsel %vm269, %v243, %v256
        %274 = vrot.lane.b32.xlu0 %v228, 127
        %v275 = vpop.permute.xlu0 %274
        %276 = vrot.lane.b32.xlu0 %v229, 127
        %v277 = vpop.permute.xlu0 %276
        %278 = vrot.lane.b32.xlu0 %v242, 127
        %v279 = vpop.permute.xlu0 %278
        %280 = vrot.lane.b32.xlu0 %v243, 127
        %v281 = vpop.permute.xlu0 %280
        %vm282 = vcmp.lt.s32.totalorder %v232, 127
        %v283 = vsel %vm282, %v275, %v279
        %v284 = vsel %vm282, %v277, %v281
        %v285 = vsel %vm282, %v279, %v275
        %v286 = vsel %vm282, %v281, %v277
        %v287 = vsel %vm235, 1, 0
        %v288 = vlaneseq
        %v289 = vshrl.u32 %v288, 7
        %v290 = vsub.s32 0, %v289
        %v291 = vrot.slane %v287, %v290
        %v292 = vlaneseq
        %v293 = vshrl.u32 %v292, 7
        %v294 = vsub.s32 1, %v293
        %v295 = vrot.slane %v287, %v294
        %vm296 = vcmp.eq.s32.totalorder %v291, 1
        %vm297 = vcmp.eq.s32.totalorder %v295, 1
        %v298 = vsel %vm296, %v228, %v283
        %v299 = vsel %vm297, %v242, %v285
        %v300 = vsel %vm296, %v229, %v284
        %v301 = vsel %vm297, %v243, %v286
        %302 = vrot.lane.b32.xlu0 %v270, 16
        %v303 = vpop.permute.xlu0 %302
        %304 = vrot.lane.b32.xlu0 %v272, 16
        %v305 = vpop.permute.xlu0 %304
        %306 = vrot.lane.b32.xlu0 %v271, 16
        %v307 = vpop.permute.xlu0 %306
        %308 = vrot.lane.b32.xlu0 %v273, 16
        %v309 = vpop.permute.xlu0 %308
        %v310 = vsel %vm236, %v303, %v307
        %v311 = vsel %vm236, %v305, %v309
        %v312 = vsel %vm236, %v307, %v303
        %v313 = vsel %vm236, %v309, %v305
        %v314 = vsel %vm236, 1, 0
        %v315 = vsel %vm237, 1, 0
        %vm316 = vcmp.eq.s32.totalorder %v314, 1
        %vm317 = vcmp.eq.s32.totalorder %v315, 1
        %v318 = vsel %vm316, %v270, %v312
        %v319 = vsel %vm317, %v271, %v310
        %v320 = vsel %vm316, %v272, %v313
        %v321 = vsel %vm317, %v273, %v311
        %v322 = vld [vmem:[%s225] ss:$8 sm:$0x3]
        %s323 = scalar_lea.vmem %s225, 32
        %v324 = vld [vmem:[%s323] ss:$8 sm:$0x3]
        %v327 = vlaneseq
        %v328 = vshrl.u32 %v327, 7
        %v329 = vsub.s32 0, %v328
        %v330 = vrot.slane %v322, %v329
        %v331 = vlaneseq
        %v332 = vshrl.u32 %v331, 7
        %v333 = vsub.s32 1, %v332
        %v334 = vrot.slane %v322, %v333
        %v335 = vlaneseq
        %v336 = vshrl.u32 %v335, 7
        %v337 = vsub.s32 0, %v336
        %v338 = vrot.slane %v324, %v337
        %v339 = vlaneseq
        %v340 = vshrl.u32 %v339, 7
        %v341 = vsub.s32 1, %v340
        %v342 = vrot.slane %v324, %v341
        %v347 = vmul.f32 %v330, %v318
        %v348 = vmul.f32 %v334, %v319
        %v349 = vmul.f32 %v338, %v320
        %v350 = vmul.f32 %v342, %v321
        %v351 = vadd.f32 %v347, 0.0
        %v352 = vadd.f32 %v348, 0.0
        %v353 = vadd.f32 %v349, 0.0
        %v354 = vadd.f32 %v350, 0.0
        %355 = vrot.lane.b32.xlu0 %v228, 16
        %v356 = vpop.permute.xlu0 %355
        %357 = vrot.lane.b32.xlu0 %v229, 16
        %v358 = vpop.permute.xlu0 %357
        %359 = vrot.lane.b32.xlu0 %v242, 16
        %v360 = vpop.permute.xlu0 %359
        %361 = vrot.lane.b32.xlu0 %v243, 16
        %v362 = vpop.permute.xlu0 %361
        %v363 = vsel %vm236, %v356, %v360
        %v364 = vsel %vm236, %v358, %v362
        %v365 = vsel %vm236, %v360, %v356
        %v366 = vsel %vm236, %v362, %v358
        %v367 = vsel %vm316, %v228, %v365
        %v368 = vsel %vm317, %v242, %v363
        %v369 = vsel %vm316, %v229, %v366
        %v370 = vsel %vm317, %v243, %v364
        %s371 = scalar_lea.vmem %s225, 1
        %v372 = vld [vmem:[%s371] ss:$8 sm:$0x3]
        %s373 = scalar_lea.vmem %s225, 33
        %v374 = vld [vmem:[%s373] ss:$8 sm:$0x3]
        %v377 = vlaneseq
        %v378 = vshrl.u32 %v377, 7
        %v379 = vsub.s32 0, %v378
        %v380 = vrot.slane %v372, %v379
        %v381 = vlaneseq
        %v382 = vshrl.u32 %v381, 7
        %v383 = vsub.s32 1, %v382
        %v384 = vrot.slane %v372, %v383
        %v385 = vlaneseq
        %v386 = vshrl.u32 %v385, 7
        %v387 = vsub.s32 0, %v386
        %v388 = vrot.slane %v374, %v387
        %v389 = vlaneseq
        %v390 = vshrl.u32 %v389, 7
        %v391 = vsub.s32 1, %v390
        %v392 = vrot.slane %v374, %v391
        %v397 = vmul.f32 %v380, %v367
        %v398 = vmul.f32 %v384, %v368
        %v399 = vmul.f32 %v388, %v369
        %v400 = vmul.f32 %v392, %v370
        %v401 = vadd.f32 %v351, %v397
        %v402 = vadd.f32 %v352, %v398
        %v403 = vadd.f32 %v353, %v399
        %v404 = vadd.f32 %v354, %v400
        %405 = vrot.lane.b32.xlu0 %v298, 16
        %v406 = vpop.permute.xlu0 %405
        %407 = vrot.lane.b32.xlu0 %v300, 16
        %v408 = vpop.permute.xlu0 %407
        %409 = vrot.lane.b32.xlu0 %v299, 16
        %v410 = vpop.permute.xlu0 %409
        %411 = vrot.lane.b32.xlu0 %v301, 16
        %v412 = vpop.permute.xlu0 %411
        %v413 = vsel %vm236, %v406, %v410
        %v414 = vsel %vm236, %v408, %v412
        %v415 = vsel %vm236, %v410, %v406
        %v416 = vsel %vm236, %v412, %v408
        %v417 = vsel %vm316, %v298, %v415
        %v418 = vsel %vm317, %v299, %v413
        %v419 = vsel %vm316, %v300, %v416
        %v420 = vsel %vm317, %v301, %v414
        %s421 = scalar_lea.vmem %s225, 2
        %v422 = vld [vmem:[%s421] ss:$8 sm:$0x3]
        %s423 = scalar_lea.vmem %s225, 34
        %v424 = vld [vmem:[%s423] ss:$8 sm:$0x3]
        %v427 = vlaneseq
        %v428 = vshrl.u32 %v427, 7
        %v429 = vsub.s32 0, %v428
        %v430 = vrot.slane %v422, %v429
        %v431 = vlaneseq
        %v432 = vshrl.u32 %v431, 7
        %v433 = vsub.s32 1, %v432
        %v434 = vrot.slane %v422, %v433
        %v435 = vlaneseq
        %v436 = vshrl.u32 %v435, 7
        %v437 = vsub.s32 0, %v436
        %v438 = vrot.slane %v424, %v437
        %v439 = vlaneseq
        %v440 = vshrl.u32 %v439, 7
        %v441 = vsub.s32 1, %v440
        %v442 = vrot.slane %v424, %v441
        %v447 = vmul.f32 %v430, %v417
        %v448 = vmul.f32 %v434, %v418
        %v449 = vmul.f32 %v438, %v419
        %v450 = vmul.f32 %v442, %v420
        %v451 = vadd.f32 %v401, %v447
        %v452 = vadd.f32 %v402, %v448
        %v453 = vadd.f32 %v403, %v449
        %v454 = vadd.f32 %v404, %v450
        %s455 = scalar_lea.vmem %s225, 3
        %v456 = vld [vmem:[%s455] ss:$8 sm:$0x3]
        %s457 = scalar_lea.vmem %s225, 35
        %v458 = vld [vmem:[%s457] ss:$8 sm:$0x3]
        %v461 = vlaneseq
        %v462 = vshrl.u32 %v461, 7
        %v463 = vsub.s32 0, %v462
        %v464 = vrot.slane %v456, %v463
        %v465 = vlaneseq
        %v466 = vshrl.u32 %v465, 7
        %v467 = vsub.s32 1, %v466
        %v468 = vrot.slane %v456, %v467
        %v469 = vlaneseq
        %v470 = vshrl.u32 %v469, 7
        %v471 = vsub.s32 0, %v470
        %v472 = vrot.slane %v458, %v471
        %v473 = vlaneseq
        %v474 = vshrl.u32 %v473, 7
        %v475 = vsub.s32 1, %v474
        %v476 = vrot.slane %v458, %v475
        %v481 = vmul.f32 %v464, %v270
        %v482 = vmul.f32 %v468, %v271
        %v483 = vmul.f32 %v472, %v272
        %v484 = vmul.f32 %v476, %v273
        %v485 = vadd.f32 %v451, %v481
        %v486 = vadd.f32 %v452, %v482
        %v487 = vadd.f32 %v453, %v483
        %v488 = vadd.f32 %v454, %v484
        %s489 = scalar_lea.vmem %s225, 4
        %v490 = vld [vmem:[%s489] ss:$8 sm:$0x3]
        %s491 = scalar_lea.vmem %s225, 36
        %v492 = vld [vmem:[%s491] ss:$8 sm:$0x3]
        %v495 = vlaneseq
        %v496 = vshrl.u32 %v495, 7
        %v497 = vsub.s32 0, %v496
        %v498 = vrot.slane %v490, %v497
        %v499 = vlaneseq
        %v500 = vshrl.u32 %v499, 7
        %v501 = vsub.s32 1, %v500
        %v502 = vrot.slane %v490, %v501
        %v503 = vlaneseq
        %v504 = vshrl.u32 %v503, 7
        %v505 = vsub.s32 0, %v504
        %v506 = vrot.slane %v492, %v505
        %v507 = vlaneseq
        %v508 = vshrl.u32 %v507, 7
        %v509 = vsub.s32 1, %v508
        %v510 = vrot.slane %v492, %v509
        %v515 = vmul.f32 %v498, %v228
        %v516 = vmul.f32 %v502, %v242
        %v517 = vmul.f32 %v506, %v229
        %v518 = vmul.f32 %v510, %v243
        %v519 = vadd.f32 %v485, %v515
        %v520 = vadd.f32 %v486, %v516
        %v521 = vadd.f32 %v487, %v517
        %v522 = vadd.f32 %v488, %v518
        %s523 = scalar_lea.vmem %s225, 5
        %v524 = vld [vmem:[%s523] ss:$8 sm:$0x3]
        %s525 = scalar_lea.vmem %s225, 37
        %v526 = vld [vmem:[%s525] ss:$8 sm:$0x3]
        %v529 = vlaneseq
        %v530 = vshrl.u32 %v529, 7
        %v531 = vsub.s32 0, %v530
        %v532 = vrot.slane %v524, %v531
        %v533 = vlaneseq
        %v534 = vshrl.u32 %v533, 7
        %v535 = vsub.s32 1, %v534
        %v536 = vrot.slane %v524, %v535
        %v537 = vlaneseq
        %v538 = vshrl.u32 %v537, 7
        %v539 = vsub.s32 0, %v538
        %v540 = vrot.slane %v526, %v539
        %v541 = vlaneseq
        %v542 = vshrl.u32 %v541, 7
        %v543 = vsub.s32 1, %v542
        %v544 = vrot.slane %v526, %v543
        %v549 = vmul.f32 %v532, %v298
        %v550 = vmul.f32 %v536, %v299
        %v551 = vmul.f32 %v540, %v300
        %v552 = vmul.f32 %v544, %v301
        %v553 = vadd.f32 %v519, %v549
        %v554 = vadd.f32 %v520, %v550
        %v555 = vadd.f32 %v521, %v551
        %v556 = vadd.f32 %v522, %v552
        %557 = vrot.lane.b32.xlu0 %v270, 112
        %v558 = vpop.permute.xlu0 %557
        %559 = vrot.lane.b32.xlu0 %v272, 112
        %v560 = vpop.permute.xlu0 %559
        %561 = vrot.lane.b32.xlu0 %v271, 112
        %v562 = vpop.permute.xlu0 %561
        %563 = vrot.lane.b32.xlu0 %v273, 112
        %v564 = vpop.permute.xlu0 %563
        %vm565 = vcmp.lt.s32.totalorder %v232, 112
        %v566 = vsel %vm565, %v558, %v562
        %v567 = vsel %vm565, %v560, %v564
        %v568 = vsel %vm565, %v562, %v558
        %v569 = vsel %vm565, %v564, %v560
        %v570 = vsel %vm238, 1, 0
        %v571 = vsel %vm239, 1, 0
        %vm572 = vcmp.eq.s32.totalorder %v570, 1
        %vm573 = vcmp.eq.s32.totalorder %v571, 1
        %v574 = vsel %vm572, %v270, %v566
        %v575 = vsel %vm573, %v271, %v568
        %v576 = vsel %vm572, %v272, %v567
        %v577 = vsel %vm573, %v273, %v569
        %s578 = scalar_lea.vmem %s225, 6
        %v579 = vld [vmem:[%s578] ss:$8 sm:$0x3]
        %s580 = scalar_lea.vmem %s225, 38
        %v581 = vld [vmem:[%s580] ss:$8 sm:$0x3]
        %v584 = vlaneseq
        %v585 = vshrl.u32 %v584, 7
        %v586 = vsub.s32 0, %v585
        %v587 = vrot.slane %v579, %v586
        %v588 = vlaneseq
        %v589 = vshrl.u32 %v588, 7
        %v590 = vsub.s32 1, %v589
        %v591 = vrot.slane %v579, %v590
        %v592 = vlaneseq
        %v593 = vshrl.u32 %v592, 7
        %v594 = vsub.s32 0, %v593
        %v595 = vrot.slane %v581, %v594
        %v596 = vlaneseq
        %v597 = vshrl.u32 %v596, 7
        %v598 = vsub.s32 1, %v597
        %v599 = vrot.slane %v581, %v598
        %v604 = vmul.f32 %v587, %v574
        %v605 = vmul.f32 %v591, %v575
        %v606 = vmul.f32 %v595, %v576
        %v607 = vmul.f32 %v599, %v577
        %v608 = vadd.f32 %v553, %v604
        %v609 = vadd.f32 %v554, %v605
        %v610 = vadd.f32 %v555, %v606
        %v611 = vadd.f32 %v556, %v607
        %612 = vrot.lane.b32.xlu0 %v228, 112
        %v613 = vpop.permute.xlu0 %612
        %614 = vrot.lane.b32.xlu0 %v229, 112
        %v615 = vpop.permute.xlu0 %614
        %616 = vrot.lane.b32.xlu0 %v242, 112
        %v617 = vpop.permute.xlu0 %616
        %618 = vrot.lane.b32.xlu0 %v243, 112
        %v619 = vpop.permute.xlu0 %618
        %v620 = vsel %vm565, %v613, %v617
        %v621 = vsel %vm565, %v615, %v619
        %v622 = vsel %vm565, %v617, %v613
        %v623 = vsel %vm565, %v619, %v615
        %v624 = vsel %vm572, %v228, %v620
        %v625 = vsel %vm573, %v242, %v622
        %v626 = vsel %vm572, %v229, %v621
        %v627 = vsel %vm573, %v243, %v623
        %s628 = scalar_lea.vmem %s225, 7
        %v629 = vld [vmem:[%s628] ss:$8 sm:$0x3]
        %s630 = scalar_lea.vmem %s225, 39
        %v631 = vld [vmem:[%s630] ss:$8 sm:$0x3]
        %v634 = vlaneseq
        %v635 = vshrl.u32 %v634, 7
        %v636 = vsub.s32 0, %v635
        %v637 = vrot.slane %v629, %v636
        %v638 = vlaneseq
        %v639 = vshrl.u32 %v638, 7
        %v640 = vsub.s32 1, %v639
        %v641 = vrot.slane %v629, %v640
        %v642 = vlaneseq
        %v643 = vshrl.u32 %v642, 7
        %v644 = vsub.s32 0, %v643
        %v645 = vrot.slane %v631, %v644
        %v646 = vlaneseq
        %v647 = vshrl.u32 %v646, 7
        %v648 = vsub.s32 1, %v647
        %v649 = vrot.slane %v631, %v648
        %v654 = vmul.f32 %v637, %v624
        %v655 = vmul.f32 %v641, %v625
        %v656 = vmul.f32 %v645, %v626
        %v657 = vmul.f32 %v649, %v627
        %v658 = vadd.f32 %v608, %v654
        %v659 = vadd.f32 %v609, %v655
        %v660 = vadd.f32 %v610, %v656
        %v661 = vadd.f32 %v611, %v657
        %662 = vrot.lane.b32.xlu0 %v298, 112
        %v663 = vpop.permute.xlu0 %662
        %664 = vrot.lane.b32.xlu0 %v300, 112
        %v665 = vpop.permute.xlu0 %664
        %666 = vrot.lane.b32.xlu0 %v299, 112
        %v667 = vpop.permute.xlu0 %666
        %668 = vrot.lane.b32.xlu0 %v301, 112
        %v669 = vpop.permute.xlu0 %668
        %v670 = vsel %vm565, %v663, %v667
        %v671 = vsel %vm565, %v665, %v669
        %v672 = vsel %vm565, %v667, %v663
        %v673 = vsel %vm565, %v669, %v665
        %v674 = vsel %vm572, %v298, %v670
        %v675 = vsel %vm573, %v299, %v672
        %v676 = vsel %vm572, %v300, %v671
        %v677 = vsel %vm573, %v301, %v673
        %s678 = scalar_lea.vmem %s225, 16
        %v679 = vld [vmem:[%s678] ss:$8 sm:$0x3]
        %s680 = scalar_lea.vmem %s225, 48
        %v681 = vld [vmem:[%s680] ss:$8 sm:$0x3]
        %v684 = vlaneseq
        %v685 = vshrl.u32 %v684, 7
        %v686 = vsub.s32 0, %v685
        %v687 = vrot.slane %v679, %v686
        %v688 = vlaneseq
        %v689 = vshrl.u32 %v688, 7
        %v690 = vsub.s32 1, %v689
        %v691 = vrot.slane %v679, %v690
        %v692 = vlaneseq
        %v693 = vshrl.u32 %v692, 7
        %v694 = vsub.s32 0, %v693
        %v695 = vrot.slane %v681, %v694
        %v696 = vlaneseq
        %v697 = vshrl.u32 %v696, 7
        %v698 = vsub.s32 1, %v697
        %v699 = vrot.slane %v681, %v698
        %v704 = vmul.f32 %v687, %v674
        %v705 = vmul.f32 %v691, %v675
        %v706 = vmul.f32 %v695, %v676
        %v707 = vmul.f32 %v699, %v677
        %v708 = vadd.f32 %v658, %v704
        %v709 = vadd.f32 %v659, %v705
        %v710 = vadd.f32 %v660, %v706
        %v711 = vadd.f32 %v661, %v707
        %v716 = vcombine.low %v708, %v709
        %v717 = vcombine.low %v710, %v711
        %v720 = vsub.f32 %v228, %v716
        %v721 = vsub.f32 %v229, %v717
        %722 = vst [vmem:[%s208] sm:$0xff] %v720
        %723 = vst [vmem:[%s208 + $0x8] sm:$0xff] %v721
        %s724 = sand.u32 %s114, 1
        %s725 = scalar_lea.sflag [#allocation3], %s724
        %s726 = sand.u32 %s114, 1
        %s727 = smul.addr %s726, 16
        %s728 = scalar_lea.vmem [#allocation2], %s727
        // Predicated region
        $region33: #{tpu_custom_call.1} parent=31 // pred_check
          %p729 = pneg %p124
        $region34: #{tpu_custom_call.1} parent=31 // pred_check_branch
          %731 = sbr.rel (%p729) target = $region36
        $region35: #{tpu_custom_call.1} parent=31 // pred_region
          %s732 = smul.u32 2, %s21
          %s734 = ssub.s32 256, 256
          %735 = vsyncadd %s725, %s734
          %s736 = smul.addr %s22, 2
          %s737 = smul.addr %s732, 2
          %s738 = sadd.s32 %s736, %s737
          %s739 = smul.addr %s738, 64
          %s740 = scalar_lea.hbm %s3, %s739
          %s741 = sshll.u32 %s728, 4
          %s742 = int_to_ptr.vmem [resolvable:$true] %s741
          %747 = dma.vmem_to_hbm [thread:$0]  %s742, 256, %s740, %s725, 128, 128, 8
        $region36: #{tpu_custom_call.1} parent=31 // pred_fallthru
          _
      $region32: #{tpu_custom_call.1} parent=5 // pred_fallthru
        _
      %p748 = scmp.le.s32.totalorder 2, %s12
      // Predicated region
      $region37: #{tpu_custom_call.1} parent=5 // pred_check
        %p749 = pneg %p748
      $region38: #{tpu_custom_call.1} parent=5 // pred_check_branch
        %751 = sbr.rel (%p749) target = $region40
      $region39: #{tpu_custom_call.1} parent=5 // pred_region
        %s752 = ssub.s32 %s12, 2
        // Predicated region
        $region41: #{tpu_custom_call.1} parent=39 // pred_check
          %p753 = pneg %p130
        $region42: #{tpu_custom_call.1} parent=39 // pred_check_branch
          %755 = sbr.rel (%p753) target = $region44
        $region43: #{tpu_custom_call.1} parent=39 // pred_region
          %s756 = sand.u32 %s115, 1
          %s757 = scalar_lea.sflag [#allocation3], %s756
          %s758 = sand.u32 %s115, 1
          %s759 = smul.addr %s758, 16
          %s760 = scalar_lea.vmem [#allocation2], %s759
          %761 = dma.done %s757, 256
        $region44: #{tpu_custom_call.1} parent=39 // pred_fallthru
          _
      $region40: #{tpu_custom_call.1} parent=5 // pred_fallthru
        _
    $region6: #{tpu_custom_call.1} parent=1 // loop_footer
      %s16 = sadd.s32 1, %s12
    $region7: #{tpu_custom_call.1} parent=1 // loop_footer_branch
      %11 = sbr.rel target = $region3
    $region8: #{tpu_custom_call.1} parent=1 // loop_exit
      _
    %762 = vsyncpa [#allocation3], 1
    %s763 = scalar_lea.sflag [#allocation3], 1
    %764 = vsyncpa %s763, 1

</llo_original>
